<compile_context>
chip_gen: v5e
topology: v5e:2x2
jax: 0.10.0
libtpu: 0.0.40
codegen_flags: <defaults>
</compile_context>

<pallas_src>
import functools

import jax
import jax.numpy as jnp
from jax.experimental import pallas as pl
from jax.experimental.pallas import tpu as pltpu


# ---------------------------------------------------------------------------
# In-kernel helpers
# ---------------------------------------------------------------------------

def _ln(x, g, b, eps=1e-5):
    """LayerNorm over the last dim (f32 math). x: (R, D), g/b: (1, D)."""
    mu = jnp.mean(x, axis=-1, keepdims=True)
    xc = x - mu
    var = jnp.mean(xc * xc, axis=-1, keepdims=True)
    return xc * jax.lax.rsqrt(var + eps) * g + b


# ---------------------------------------------------------------------------
# Patch-embed linear (Normalize folded into weight/bias; weights already bf16)
# ---------------------------------------------------------------------------

def _linear_kernel(a_ref, w_ref, b_ref, o_ref):
    acc = jnp.dot(a_ref[...].astype(jnp.bfloat16), w_ref[...],
                  preferred_element_type=jnp.float32) + b_ref[...]
    o_ref[...] = acc.astype(o_ref.dtype)


def pallas_linear(a, w_bf16, b, tm=256):
    """o = a @ w + b. a: (M, K) f32, w: (K, N) bf16, b: (N,) f32."""
    M, K = a.shape
    K2, N = w_bf16.shape
    assert K == K2
    tm = min(M, tm)
    grid_m = pl.cdiv(M, tm)
    return pl.pallas_call(
        _linear_kernel,
        out_shape=jax.ShapeDtypeStruct((M, N), jnp.float32),
        grid=(grid_m,),
        in_specs=[
            pl.BlockSpec((tm, K), lambda i: (i, 0)),
            pl.BlockSpec((K, N), lambda i: (0, 0)),
            pl.BlockSpec((1, N), lambda i: (0, 0)),
        ],
        out_specs=pl.BlockSpec((tm, N), lambda i: (i, 0)),
        compiler_params=pltpu.CompilerParams(dimension_semantics=("parallel",)),
    )(a, w_bf16, b.reshape(1, N).astype(jnp.float32))


# ---------------------------------------------------------------------------
# Fully fused ViT encoder: stem + all transformer blocks + head in ONE
# pallas_call. grid=(L,) over layers; residual stream is VMEM-resident.
# ---------------------------------------------------------------------------

def _encoder_kernel(tok_ref, pos_ref, lnpre_g, lnpre_b,
                    ln1_g, ln1_b, wqkv_ref, bqkv_ref, wo_ref, bo_ref,
                    ln2_g, ln2_b, wfc_ref, bfc_ref, wpr_ref, bpr_ref,
                    lnpost_g, lnpost_b, proj_ref,
                    feat_ref, res_ref, *, B, S, E, heads):
    l = pl.program_id(0)
    Dh = E // heads
    scale = 1.0 / float(Dh) ** 0.5

    # --- stem (layer 0 only): pos-embed add + ln_pre -> residual scratch ---
    @pl.when(l == 0)
    def _():
        t = tok_ref[...] + pos_ref[...][None, :, :]            # (B, S, E)
        res_ref[...] = _ln(t.reshape(B * S, E), lnpre_g[...], lnpre_b[...])

    # --- one transformer block on the VMEM-resident residual stream --------
    x = res_ref[...]                                           # (B*S, E) f32
    h = _ln(x, ln1_g[...], ln1_b[...])
    qkv = jnp.dot(h.astype(jnp.bfloat16), wqkv_ref[...],
                  preferred_element_type=jnp.float32) + bqkv_ref[...]   # (B*S, 3E)

    # Per-(batch, head) softmax attention (static unroll over small B, heads);
    # all contexts are gathered into one (B*S, E) slab so the out-projection
    # below is a single full-depth (K=E) matmul.
    # TODO(synk): for real CLIP widths (heads>=12, Dh=64) pre-permute wqkv so
    #             each head's Q/K/V start at 128-lane boundaries.
    ctx_rows = []
    for b in range(B):
        r0 = b * S
        head_ctx = []
        for hh in range(heads):
            lo = hh * Dh
            qh = (qkv[r0:r0 + S, lo:lo + Dh] * scale).astype(jnp.bfloat16)
            kh = qkv[r0:r0 + S, E + lo:E + lo + Dh].astype(jnp.bfloat16)
            vh = qkv[r0:r0 + S, 2 * E + lo:2 * E + lo + Dh].astype(jnp.bfloat16)
            s = jnp.einsum('qd,kd->qk', qh, kh, preferred_element_type=jnp.float32)
            s = s - jnp.max(s, axis=-1, keepdims=True)
            e = jnp.exp(s)
            p = e * pl.reciprocal(jnp.sum(e, axis=-1, keepdims=True), approx=True)
            head_ctx.append(jnp.dot(p.astype(jnp.bfloat16), vh,
                                    preferred_element_type=jnp.float32))
        ctx_rows.append(jnp.concatenate(head_ctx, axis=-1))    # (S, E)
    ctx = jnp.concatenate(ctx_rows, axis=0)                    # (B*S, E)

    attn = jnp.dot(ctx.astype(jnp.bfloat16), wo_ref[...],
                   preferred_element_type=jnp.float32) + bo_ref[...]
    x1 = x + attn

    # MLP: LN2 -> fc -> QuickGELU -> proj -> residual
    h2 = _ln(x1, ln2_g[...], ln2_b[...])
    m = jnp.dot(h2.astype(jnp.bfloat16), wfc_ref[...],
                preferred_element_type=jnp.float32) + bfc_ref[...]
    m = m * jax.nn.sigmoid(1.702 * m)                          # QuickGELU
    m2 = jnp.dot(m.astype(jnp.bfloat16), wpr_ref[...],
                 preferred_element_type=jnp.float32) + bpr_ref[...]
    x2 = x1 + m2
    res_ref[...] = x2

    # --- head (last layer only): ln_post on CLS rows + visual.proj ---------
    @pl.when(l == pl.num_programs(0) - 1)
    def _():
        cls = jnp.concatenate([x2[b * S:b * S + 1, :] for b in range(B)], axis=0)
        h3 = _ln(cls, lnpost_g[...], lnpost_b[...])
        feat_ref[...] = jnp.dot(h3.astype(jnp.bfloat16), proj_ref[...],
                                preferred_element_type=jnp.float32
                                ).astype(feat_ref.dtype)


def pallas_vit_encoder(tokens, p, *, heads):
    B, S, E = tokens.shape
    L, _, F = p["w_fc"].shape
    D = p["proj"].shape[1]

    def per_layer(*shape):
        # Stacked (L, *shape) parameter: layer grid index selects the slice,
        # leading dim squeezed out of the kernel ref. Default double-buffering
        # prefetches layer l+1's weights while layer l computes.
        return pl.BlockSpec((None,) + shape, lambda l: (l,) + (0,) * len(shape))

    def shared(*shape):
        # Constant across the layer grid (tokens, pos, ln_pre/post, proj).
        return pl.BlockSpec(shape, lambda l: (0,) * len(shape))

    kernel = functools.partial(_encoder_kernel, B=B, S=S, E=E, heads=heads)

    return pl.pallas_call(
        kernel,
        out_shape=jax.ShapeDtypeStruct((B, D), jnp.float32),
        grid=(L,),
        in_specs=[
            shared(B, S, E),                            # tokens
            shared(S, E),                               # positional embedding
            shared(1, E), shared(1, E),                 # ln_pre gamma/beta
            per_layer(1, E), per_layer(1, E),           # ln_1 gamma/beta
            per_layer(E, 3 * E), per_layer(1, 3 * E),   # fused QKV (bf16) / bias
            per_layer(E, E), per_layer(1, E),           # attn out-proj (bf16) / bias
            per_layer(1, E), per_layer(1, E),           # ln_2 gamma/beta
            per_layer(E, F), per_layer(1, F),           # mlp.c_fc (bf16) / bias
            per_layer(F, E), per_layer(1, E),           # mlp.c_proj (bf16) / bias
            shared(1, E), shared(1, E),                 # ln_post gamma/beta
            shared(E, D),                               # visual.proj (bf16)
        ],
        out_specs=pl.BlockSpec((B, D), lambda l: (0, 0)),
        scratch_shapes=[pltpu.VMEM((B * S, E), jnp.float32)],   # residual stream
        compiler_params=pltpu.CompilerParams(
            dimension_semantics=("arbitrary",),         # layer axis carries state
            vmem_limit_bytes=48 * 1024 * 1024,          # safe on v5e/v6e/v7x
        ),
    )(tokens, p["pos"], p["ln_pre_g"], p["ln_pre_b"],
      p["ln1_g"], p["ln1_b"], p["wqkv"], p["bqkv"], p["wo"], p["bo"],
      p["ln2_g"], p["ln2_b"], p["w_fc"], p["b_fc"], p["w_proj"], p["b_proj"],
      p["ln_post_g"], p["ln_post_b"], p["proj"])


# ---------------------------------------------------------------------------
# Parameters (already in the fused / stacked / bf16 deployment layout)
# ---------------------------------------------------------------------------

def init_params(key, *, img=32, patch=8, width=128, layers=2, heads=2,
                embed_dim=128):
    g = img // patch
    S = g * g + 1
    L = layers
    keys = jax.random.split(key, 12)
    kit = iter(keys)

    def nrm(shape, scale=0.02):
        return scale * jax.random.normal(next(kit), shape, dtype=jnp.float32)

    # Fold Normalize(mean, std) into the bias-free patch-embed matmul:
    #   ((x - mean)/std) @ W == x @ (inv_std * W) + (-(mean*inv_std) @ W)
    mean = jnp.array([0.48145466, 0.4578275, 0.40821073], jnp.float32)
    std = jnp.array([0.26862954, 0.26130258, 0.27577711], jnp.float32)
    conv_w = nrm((3 * patch * patch, width))            # conv1 flattened (C*p*p, width)
    inv = 1.0 / std
    w_patch = (conv_w * jnp.repeat(inv, patch * patch)[:, None]).astype(jnp.bfloat16)
    b_patch = -(jnp.repeat(mean * inv, patch * patch) @ conv_w)   # (width,) f32

    return {
        "patch": patch, "width": width, "heads": heads, "embed_dim": embed_dim,
        "w_patch": w_patch, "b_patch": b_patch,
        "cls": nrm((width,)),
        "pos": nrm((S, width)),
        "ln_pre_g": jnp.ones((1, width), jnp.float32),
        "ln_pre_b": jnp.zeros((1, width), jnp.float32),
        # per-layer params stacked on a leading L axis; matmul weights in bf16
        "ln1_g": jnp.ones((L, 1, width), jnp.float32),
        "ln1_b": jnp.zeros((L, 1, width), jnp.float32),
        "wqkv": nrm((L, width, 3 * width)).astype(jnp.bfloat16),
        "bqkv": nrm((L, 1, 3 * width)),
        "wo": nrm((L, width, width)).astype(jnp.bfloat16),
        "bo": nrm((L, 1, width)),
        "ln2_g": jnp.ones((L, 1, width), jnp.float32),
        "ln2_b": jnp.zeros((L, 1, width), jnp.float32),
        "w_fc": nrm((L, width, 4 * width)).astype(jnp.bfloat16),
        "b_fc": nrm((L, 1, 4 * width)),
        "w_proj": nrm((L, 4 * width, width)).astype(jnp.bfloat16),
        "b_proj": nrm((L, 1, width)),
        "ln_post_g": jnp.ones((1, width), jnp.float32),
        "ln_post_b": jnp.zeros((1, width), jnp.float32),
        "proj": nrm((width, embed_dim)).astype(jnp.bfloat16),
    }


# ---------------------------------------------------------------------------
# Forward: ClipModel.forward == visual(normalize(x)); classifier is None
# ---------------------------------------------------------------------------

def clip_model_forward(params, x):
    B, C, H, W = x.shape
    p = params["patch"]
    width = params["width"]
    g = H // p

    # conv1 patch embed as a matmul: extract non-overlapping patches (XLA glue)
    patches = (
        x.reshape(B, C, g, p, g, p)
        .transpose(0, 2, 4, 1, 3, 5)                   # (B, gh, gw, C, ph, pw)
        .reshape(B * g * g, C * p * p)
    )
    emb = pallas_linear(patches, params["w_patch"], params["b_patch"])
    emb = emb.reshape(B, g * g, width)

    # class token; pos-embed add + ln_pre happen inside the fused encoder
    cls = jnp.broadcast_to(params["cls"].reshape(1, 1, width), (B, 1, width))
    tokens = jnp.concatenate([cls, emb], axis=1)       # (B, S, width), f32

    return pallas_vit_encoder(tokens, params, heads=params["heads"])


if __name__ == "__main__":
    key = jax.random.PRNGKey(0)
    kx, kp = jax.random.split(key)

    # Small, lane-dense synthetic config: 32x32 image, patch 8 -> 16 patches
    # + CLS = 17 tokens, width 128, 2 heads (Dh=64), 2 layers, embed_dim 128.
    x = jax.random.uniform(kx, (2, 3, 32, 32), dtype=jnp.float32)   # NCHW like PyTorch
    params = init_params(kp, img=32, patch=8, width=128, layers=2, heads=2,
                         embed_dim=128)

    feats = jax.block_until_ready(clip_model_forward(params, x))
    assert feats.shape == (2, 128) and feats.dtype == jnp.float32
    assert bool(jnp.all(jnp.isfinite(feats)))
    print("KERNEL_OK")
</pallas_src>

<mosaic_0001>
module attributes {stable_mosaic.version = 11 : i64} {
  func.func @_linear_kernel(%arg0: i32, %arg1: memref<32x192xf32, #tpu.memory_space<vmem>>, %arg2: memref<192x128xbf16, #tpu.memory_space<vmem>>, %arg3: memref<1x128xf32, #tpu.memory_space<vmem>>, %arg4: memref<32x128xf32, #tpu.memory_space<vmem>>) attributes {dimension_semantics = [#tpu.dimension_semantics<parallel>], iteration_bounds = array<i64: 1>, scalar_prefetch = 0 : i64, scratch_operands = 0 : i64, tpu.core_type = #tpu.core_type<tc>, window_params = [{transform_indices = @transform_0, window_bounds = array<i64: 32, 192>}, {pipeline_mode = #tpu.pipeline_mode<synchronous>, transform_indices = @transform_1, window_bounds = array<i64: 192, 128>}, {pipeline_mode = #tpu.pipeline_mode<synchronous>, transform_indices = @transform_2, window_bounds = array<i64: 1, 128>}, {transform_indices = @transform_3, window_bounds = array<i64: 32, 128>}]} {
    %c0 = arith.constant 0 : index
    %c0_0 = arith.constant 0 : index
    %0 = vector.load %arg1[%c0, %c0_0] : memref<32x192xf32, #tpu.memory_space<vmem>>, vector<32x192xf32>
    %1 = arith.truncf %0 : vector<32x192xf32> to vector<32x192xbf16>
    %c0_1 = arith.constant 0 : index
    %c0_2 = arith.constant 0 : index
    %2 = vector.load %arg2[%c0_1, %c0_2] : memref<192x128xbf16, #tpu.memory_space<vmem>>, vector<192x128xbf16>
    %cst = arith.constant dense<0.000000e+00> : vector<32x128xf32>
    %3 = tpu.matmul %1, %2, %cst {dimension_numbers = #tpu.dot_dimension_numbers<[1], [0], [0], [1], [0, 0, 1, 1], [], []>} : vector<32x192xbf16>, vector<192x128xbf16>, vector<32x128xf32> -> vector<32x128xf32>
    %c0_3 = arith.constant 0 : index
    %c0_4 = arith.constant 0 : index
    %4 = vector.load %arg3[%c0_3, %c0_4] : memref<1x128xf32, #tpu.memory_space<vmem>>, vector<1x128xf32>
    %5 = vector.broadcast %4 : vector<1x128xf32> to vector<32x128xf32>
    %6 = arith.addf %3, %5 : vector<32x128xf32>
    %c0_5 = arith.constant 0 : index
    %c0_6 = arith.constant 0 : index
    %7 = vector.load %arg4[%c0_5, %c0_6] : memref<32x128xf32, #tpu.memory_space<vmem>>, vector<32x128xf32>
    tpu.vector_store %arg4[%c0_5, %c0_6], %6 {strides = array<i32>} : memref<32x128xf32, #tpu.memory_space<vmem>>, vector<32x128xf32>,
    return
  }
  func.func @transform_0(%arg0: i32) -> (i32, i32) {
    %c0_i32 = arith.constant 0 : i32
    %c0_i32_0 = arith.constant 0 : i32
    return %arg0, %c0_i32 : i32, i32
  }
  func.func @transform_1(%arg0: i32) -> (i32, i32) {
    %c0_i32 = arith.constant 0 : i32
    %c0_i32_0 = arith.constant 0 : i32
    %c0_i32_1 = arith.constant 0 : i32
    return %c0_i32, %c0_i32_0 : i32, i32
  }
  func.func @transform_2(%arg0: i32) -> (i32, i32) {
    %c0_i32 = arith.constant 0 : i32
    %c0_i32_0 = arith.constant 0 : i32
    %c0_i32_1 = arith.constant 0 : i32
    return %c0_i32, %c0_i32_0 : i32, i32
  }
  func.func @transform_3(%arg0: i32) -> (i32, i32) {
    %c0_i32 = arith.constant 0 : i32
    %c0_i32_0 = arith.constant 0 : i32
    return %arg0, %c0_i32 : i32, i32
  }
}

</mosaic_0001>

<llo_original>
// kernel: tpu_custom_call.1
$region0: #{tpu_custom_call.1}
  #allocation0 [shape = 'u32[]', space=smem, size = 0x4, offset = 0x4, fixed_abs, tag = 'smem constant byte address 0x4 - core index']
  #allocation1 [shape = 'u32[72,128]{1,0:T(1,128)}', space=vmem, size = 0x9000, scoped, tag = 'internal scratch']
  %s0 = inlined_call_operand.hbm [shape: f32[32,192], index: 0, kind: input, shape index: {}]
  %s1 = inlined_call_operand.hbm [shape: bf16[192,128], index: 1, kind: input, shape index: {}]
  %s2 = inlined_call_operand.vmem [shape: f32[1,128], index: 2, kind: input, shape index: {}]
  %s3 = inlined_call_operand.hbm [shape: f32[32,128], index: 3, kind: output, shape index: {}]
  %s4 = sld [smem:[#allocation0]]
  $region30: #{tpu_custom_call.1} parent=0
    _
  %s6 = ssub.s32 1, %s4
  %s7 = scalar_select 0, %s6, %s4
  $region1: #{tpu_custom_call.1} parent=0
    #allocation2 [shape = 'u8[32768]{0}', space=vmem, size = 0x8000, scoped, tag = 'input window, operand 0, single buffered']
    #allocation3 [shape = 's32[1]{0}', space=sflag, size = 0x4, scoped, tag = 'scoped memory for tpu_custom_call.1']
    #allocation4 [shape = 's32[1]{0}', space=sflag, size = 0x4, scoped, tag = 'scoped memory for tpu_custom_call.1']
    #allocation5 [shape = 'u8[49152]{0}', space=vmem, size = 0xc000, scoped, tag = 'input window, operand 1, single buffered']
    #allocation6 [shape = 's32[1]{0}', space=sflag, size = 0x4, scoped, tag = 'scoped memory for tpu_custom_call.1']
    #allocation7 [shape = 'u8[16384]{0}', space=vmem, size = 0x4000, scoped, tag = 'output window, operand 0, single buffered']
    %8 = vsyncpa [#allocation3], 0
    %9 = vsyncpa [#allocation6], 0
    %10 = vsyncpa [#allocation4], 0
    // Predicated region
    $region2: #{tpu_custom_call.1} parent=1 // pred_check
      _
    $region3: #{tpu_custom_call.1} parent=1 // pred_check_branch
      %12 = sbr.rel (0) target = $region5
    $region4: #{tpu_custom_call.1} parent=1 // pred_region
      %14 = vsyncadd [#allocation3], 0
      %s15 = sshll.u32 %s0, 4
      %s16 = int_to_ptr.hbm [resolvable:$true] %s15
      %s17 = sshll.u32 [#allocation2], 4
      %s18 = int_to_ptr.vmem [resolvable:$true] %s17
      %23 = dma.hbm_to_vmem [thread:$0]  %s16, 1024, %s18, [#allocation3], 256, 256, 16
    $region5: #{tpu_custom_call.1} parent=1 // pred_fallthru
      _
    // Predicated region
    $region6: #{tpu_custom_call.1} parent=1 // pred_check
      _
    $region7: #{tpu_custom_call.1} parent=1 // pred_check_branch
      %25 = sbr.rel (0) target = $region9
    $region8: #{tpu_custom_call.1} parent=1 // pred_region
      %27 = vsyncadd [#allocation6], 0
      %s28 = sshll.u32 %s1, 4
      %s29 = int_to_ptr.hbm [resolvable:$true] %s28
      %s30 = sshll.u32 [#allocation5], 4
      %s31 = int_to_ptr.vmem [resolvable:$true] %s30
      %36 = dma.hbm_to_vmem [thread:$0]  %s29, 1536, %s31, [#allocation6], 64, 64, 4
    $region9: #{tpu_custom_call.1} parent=1 // pred_fallthru
      _
    // Predicated region
    $region10: #{tpu_custom_call.1} parent=1 // pred_check
      _
    $region11: #{tpu_custom_call.1} parent=1 // pred_check_branch
      %38 = sbr.rel (0) target = $region13
    $region12: #{tpu_custom_call.1} parent=1 // pred_region
      _
    $region13: #{tpu_custom_call.1} parent=1 // pred_fallthru
      _
    // Predicated region
    $region14: #{tpu_custom_call.1} parent=1 // pred_check
      _
    $region15: #{tpu_custom_call.1} parent=1 // pred_check_branch
      %40 = sbr.rel (0) target = $region17
    $region16: #{tpu_custom_call.1} parent=1 // pred_region
      %42 = dma.done [#allocation3], 1024
    $region17: #{tpu_custom_call.1} parent=1 // pred_fallthru
      _
    // Predicated region
    $region18: #{tpu_custom_call.1} parent=1 // pred_check
      _
    $region19: #{tpu_custom_call.1} parent=1 // pred_check_branch
      %44 = sbr.rel (0) target = $region21
    $region20: #{tpu_custom_call.1} parent=1 // pred_region
      %46 = dma.done [#allocation6], 1536
    $region21: #{tpu_custom_call.1} parent=1 // pred_fallthru
      _
    %v48 = vld [vmem:[#allocation2] sm:$0xff]
    %v49 = vld [vmem:[#allocation2 + $0x8] sm:$0xff]
    %v50 = vld [vmem:[#allocation2 + $0x10] sm:$0xff]
    %v51 = vld [vmem:[#allocation2 + $0x18] sm:$0xff]
    %v52 = vld [vmem:[#allocation2 + $0x20] sm:$0xff]
    %v53 = vld [vmem:[#allocation2 + $0x28] sm:$0xff]
    %v54 = vld [vmem:[#allocation2 + $0x30] sm:$0xff]
    %v55 = vld [vmem:[#allocation2 + $0x38] sm:$0xff]
    %v56 = vpack.c.bf16 %v50, %v48
    %v57 = vpack.c.bf16 %v51, %v49
    %v58 = vpack.c.bf16 %v54, %v52
    %v59 = vpack.c.bf16 %v55, %v53
    %v60 = vld [vmem:[#allocation5] sm:$0xf]
    %v61 = vld [vmem:[#allocation5 + $0x4] sm:$0xf]
    %v62 = vld [vmem:[#allocation5 + $0x8] sm:$0xf]
    %v63 = vld [vmem:[#allocation5 + $0xc] sm:$0xf]
    %v64 = vld [vmem:[#allocation5 + $0x10] sm:$0xf]
    %v65 = vld [vmem:[#allocation5 + $0x14] sm:$0xf]
    %v66 = vld [vmem:[#allocation5 + $0x18] sm:$0xf]
    %v67 = vld [vmem:[#allocation5 + $0x1c] sm:$0xf]
    %v68 = vld [vmem:[#allocation5 + $0x20] sm:$0xf]
    %v69 = vld [vmem:[#allocation5 + $0x24] sm:$0xf]
    %v70 = vld [vmem:[#allocation5 + $0x28] sm:$0xf]
    %v71 = vld [vmem:[#allocation5 + $0x2c] sm:$0xf]
    %v72 = vld [vmem:[#allocation5 + $0x30] sm:$0xf]
    %v73 = vld [vmem:[#allocation5 + $0x34] sm:$0xf]
    %v74 = vld [vmem:[#allocation5 + $0x38] sm:$0xf]
    %v75 = vld [vmem:[#allocation5 + $0x3c] sm:$0xf]
    %v76 = vld [vmem:[#allocation5 + $0x40] sm:$0xf]
    %v77 = vld [vmem:[#allocation5 + $0x44] sm:$0xf]
    %v78 = vld [vmem:[#allocation5 + $0x48] sm:$0xf]
    %v79 = vld [vmem:[#allocation5 + $0x4c] sm:$0xf]
    %v80 = vld [vmem:[#allocation5 + $0x50] sm:$0xf]
    %v81 = vld [vmem:[#allocation5 + $0x54] sm:$0xf]
    %v82 = vld [vmem:[#allocation5 + $0x58] sm:$0xf]
    %v83 = vld [vmem:[#allocation5 + $0x5c] sm:$0xf]
    %v84 = vld [vmem:[%s2] sm:$0x1]
    %v86 = vperm.slane %v84, 0
    %v112 = vunpack.c.l.b16 %v60
    %v113 = vunpack.c.l.b16 %v61
    %v114 = vunpack.c.l.b16 %v62
    %v115 = vunpack.c.l.b16 %v63
    %v116 = vunpack.c.l.b16 %v64
    %v117 = vunpack.c.l.b16 %v65
    %v118 = vunpack.c.l.b16 %v66
    %v119 = vunpack.c.l.b16 %v67
    %v120 = vunpack.c.l.b16 %v68
    %v121 = vunpack.c.l.b16 %v69
    %v122 = vunpack.c.l.b16 %v70
    %v123 = vunpack.c.l.b16 %v71
    %v124 = vunpack.c.l.b16 %v72
    %v125 = vunpack.c.l.b16 %v73
    %v126 = vunpack.c.l.b16 %v74
    %v127 = vunpack.c.l.b16 %v75
    %v128 = vunpack.c.l.b16 %v76
    %v129 = vunpack.c.l.b16 %v77
    %v130 = vunpack.c.l.b16 %v78
    %v131 = vunpack.c.l.b16 %v79
    %v132 = vunpack.c.l.b16 %v80
    %v133 = vunpack.c.l.b16 %v81
    %v134 = vunpack.c.l.b16 %v82
    %v135 = vunpack.c.l.b16 %v83
    %v136 = vpack.c.b16 %v113, %v112
    %v137 = vpack.c.b16 %v115, %v114
    %v138 = vpack.c.b16 %v117, %v116
    %v139 = vpack.c.b16 %v119, %v118
    %v140 = vpack.c.b16 %v121, %v120
    %v141 = vpack.c.b16 %v123, %v122
    %v142 = vpack.c.b16 %v125, %v124
    %v143 = vpack.c.b16 %v127, %v126
    %v144 = vpack.c.b16 %v129, %v128
    %v145 = vpack.c.b16 %v131, %v130
    %v146 = vpack.c.b16 %v133, %v132
    %v147 = vpack.c.b16 %v135, %v134
    %vm160 = vcmask 523264
    %v162 = vsel %vm160, %v57, 0
    %v165 = vsel %vm160, %v59, 0
    %167 = vmatpush.bf16.msra.mxu0 %v143
    %168 = vmatpush.bf16.msra.mxu0 %v142
    %169 = vmatpush.bf16.msra.mxu0 %v141
    %170 = vmatpush.bf16.msra.mxu0 %v140
    %171 = vmatpush.bf16.msra.mxu0 %v139
    %172 = vmatpush.bf16.msra.mxu0 %v138
    %173 = vmatpush.bf16.msra.mxu0 %v137
    %174 = vmatpush.bf16.msra.mxu0 %v136
    %175 = vmatmul.bf16.gmra.mxu0 %v56
    %v176 = vpop.f32.mrf.mxu0
    %v177 = vadd.f32 %v86, %v176
    %v178 = vpop.f32.mrf.mxu0
    %v179 = vadd.f32 %v86, %v178
    %180 = vmatmul.bf16.gmra.mxu0 %v58
    %v181 = vpop.f32.mrf.mxu0
    %v182 = vadd.f32 %v86, %v181
    %v183 = vpop.f32.mrf.mxu0
    %v184 = vadd.f32 %v86, %v183
    %185 = vdwg.mxu0
    %186 = vmatpush.bf16.msra.mxu0 0
    %187 = vmatpush.bf16.msra.mxu0 0
    %188 = vmatpush.bf16.msra.mxu0 0
    %189 = vmatpush.bf16.msra.mxu0 0
    %190 = vmatpush.bf16.msra.mxu0 %v147
    %191 = vmatpush.bf16.msra.mxu0 %v146
    %192 = vmatpush.bf16.msra.mxu0 %v145
    %193 = vmatpush.bf16.msra.mxu0 %v144
    %194 = vmatmul.bf16.gmra.mxu0 %v162
    %v195 = vpop.f32.mrf.mxu0
    %v196 = vadd.f32 %v177, %v195
    %v197 = vpop.f32.mrf.mxu0
    %v198 = vadd.f32 %v179, %v197
    %199 = vmatmul.bf16.gmra.mxu0 %v165
    %v200 = vpop.f32.mrf.mxu0
    %v201 = vadd.f32 %v182, %v200
    %v202 = vpop.f32.mrf.mxu0
    %v203 = vadd.f32 %v184, %v202
    %204 = vdwg.mxu0
    %205 = vst [vmem:[#allocation7] sm:$0xff] %v196
    %206 = vst [vmem:[#allocation7 + $0x8] sm:$0xff] %v198
    %207 = vst [vmem:[#allocation7 + $0x10] sm:$0xff] %v201
    %208 = vst [vmem:[#allocation7 + $0x18] sm:$0xff] %v203
    // Predicated region
    $region22: #{tpu_custom_call.1} parent=1 // pred_check
      _
    $region23: #{tpu_custom_call.1} parent=1 // pred_check_branch
      %210 = sbr.rel (0) target = $region25
    $region24: #{tpu_custom_call.1} parent=1 // pred_region
      %212 = vsyncadd [#allocation4], 0
      %s213 = sshll.u32 [#allocation7], 4
      %s214 = int_to_ptr.vmem [resolvable:$true] %s213
      %s215 = sshll.u32 %s3, 4
      %s216 = int_to_ptr.hbm [resolvable:$true] %s215
      %221 = dma.vmem_to_hbm [thread:$0]  %s214, 512, %s216, [#allocation4], 128, 128, 8
    $region25: #{tpu_custom_call.1} parent=1 // pred_fallthru
      _
    // Predicated region
    $region26: #{tpu_custom_call.1} parent=1 // pred_check
      _
    $region27: #{tpu_custom_call.1} parent=1 // pred_check_branch
      %223 = sbr.rel (0) target = $region29
    $region28: #{tpu_custom_call.1} parent=1 // pred_region
      %225 = dma.done [#allocation4], 512
    $region29: #{tpu_custom_call.1} parent=1 // pred_fallthru
      _
    %226 = vsyncpa [#allocation3], 1
    %227 = vsyncpa [#allocation6], 1
    %228 = vsyncpa [#allocation4], 1

</llo_original>
